<compile_context>
chip_gen: v7x
topology: tpu7x:2x2x1
jax: 0.10.0
libtpu: 0.0.40
codegen_flags: <defaults>
</compile_context>

<pallas_src>
import functools

import jax
import jax.numpy as jnp
import numpy as np
from jax.experimental import pallas as pl
from jax.experimental.pallas import tpu as pltpu


def _round_up(x, m):
    return ((x + m - 1) // m) * m


def _cdiv(a, b):
    return -(-a // b)


def _tensorcores_per_chip():
    """2 on megacore chips (v7x), else 1.  Only used to pick a minimum grid."""
    try:
        kind = jax.devices()[0].device_kind.lower()
    except Exception:
        return 1
    return 2 if ("v7" in kind or "tpu7" in kind) else 1


# --------------------------------------------------------------------------
# Feature probe: does this jax build accept pipeline_mode=pl.Buffered(1)
# (single-buffering for grid-invariant operands)?  Guarantees we never fail
# at compile time because of the optimization.
# --------------------------------------------------------------------------
def _probe_copy_kernel(x_ref, o_ref):
    o_ref[...] = x_ref[...]


@functools.lru_cache(maxsize=None)
def _single_buffering_supported():
    try:
        fn = pl.pallas_call(
            _probe_copy_kernel,
            out_shape=jax.ShapeDtypeStruct((8, 128), jnp.float32),
            grid_spec=pltpu.PrefetchScalarGridSpec(
                num_scalar_prefetch=0,
                grid=(1,),
                in_specs=[pl.BlockSpec((8, 128), lambda i: (0, 0),
                                       pipeline_mode=pl.Buffered(1))],
                out_specs=pl.BlockSpec((8, 128), lambda i: (0, 0)),
            ),
        )
        jax.block_until_ready(fn(jnp.zeros((8, 128), jnp.float32)))
        return True
    except Exception:
        return False


# --------------------------------------------------------------------------
# Fused kernel body: one grid step handles TM flattened output pixels.
# --------------------------------------------------------------------------
def yolo_head_kernel(p_ref, w1_ref, b1_ref, w2_ref, b2_ref, o_ref):
    # p_ref : (TM, Kp)     im2col patches (compute dtype), rows = B*H*W
    # w1_ref: (Kp, C1p)    3x3 conv weights with the BN scale folded in
    # b1_ref: (1, C1p)     folded BN bias (f32)
    # w2_ref: (C1p, C2p)   1x1 conv weights
    # b2_ref: (1, C2p)     1x1 conv bias (f32)
    # o_ref : (TM, C2p)    output tile
    y = jnp.dot(p_ref[...], w1_ref[...], preferred_element_type=jnp.float32)
    y = y + b1_ref[...]                 # folded BN bias
    y = jnp.maximum(y, 0.1 * y)         # LeakyReLU(0.1): mul+max (2 VPU ops)
    z = jnp.dot(y.astype(w2_ref.dtype), w2_ref[...],
                preferred_element_type=jnp.float32)
    o_ref[...] = (z + b2_ref[...]).astype(o_ref.dtype)


@functools.partial(
    jax.jit,
    static_argnames=("eps", "compute_dtype", "tile_m", "out_dtype",
                     "out_layout", "single_buffer_weights", "min_grid_steps"))
def _yolo_head_impl(x_nchw, params, *, eps, compute_dtype, tile_m, out_dtype,
                    out_layout, single_buffer_weights, min_grid_steps):
    w1 = params["conv1_w"]      # (C1, Cin, 3, 3)  OIHW
    gamma = params["bn_gamma"]  # (C1,)
    beta = params["bn_beta"]    # (C1,)
    mean = params["bn_mean"]    # (C1,)
    var = params["bn_var"]      # (C1,)
    w2 = params["conv2_w"]      # (C2, C1, 1, 1)   OIHW
    b2 = params["conv2_b"]      # (C2,)

    B, Cin, H, W = x_nchw.shape
    C1 = w1.shape[0]
    C2 = w2.shape[0]
    M = B * H * W
    K = 9 * Cin

    # ---------------- static tiling / VMEM budgeting (python ints) ---------
    Kp = _round_up(K, 128)
    C1p = _round_up(C1, 128)
    C2p = _round_up(C2, 128)

    c_bytes = jnp.dtype(compute_dtype).itemsize
    o_bytes = jnp.dtype(out_dtype).itemsize
    w_bufs = 1 if single_buffer_weights else 2

    def vmem_estimate(tm):
        patches = 2 * tm * Kp * c_bytes                  # streamed, 2 buffers
        weights = w_bufs * (Kp * C1p + C1p * C2p) * c_bytes
        biases = w_bufs * (C1p + C2p) * 4
        outputs = 2 * tm * C2p * o_bytes                 # 2 output buffers
        interm = tm * C1p * 4 + tm * C2p * 4             # f32 temporaries
        return patches + weights + biases + outputs + interm

    VMEM_BUDGET = 48 * 1024 * 1024   # fits v7x's 64 MiB/TC with headroom

    TM = max(_round_up(min(tile_m, _round_up(M, 16)), 16), 16)
    while TM > 256 and int(vmem_estimate(TM) * 1.25) > VMEM_BUDGET:
        TM = _round_up(TM // 2, 16)
    # Make sure every TensorCore gets work (megacore on v7x) when M allows.
    while TM > 16 and _cdiv(M, TM) < min_grid_steps:
        TM = _round_up(max(TM // 2, 16), 16)

    Mp = _round_up(M, TM)
    vmem_limit = min(max(int(vmem_estimate(TM) * 1.25) + (2 << 20), 32 << 20),
                     VMEM_BUDGET)

    # ---------------- glue: BN fold + im2col (plain JAX / XLA) -------------
    scale = gamma / jnp.sqrt(var + eps)                  # fold in f32
    bias1 = beta - mean * scale
    # OIHW -> (kh, kw, Cin, C1) -> (K, C1); fold BN scale per output channel.
    w1_mat = (jnp.transpose(w1, (2, 3, 1, 0)).reshape(K, C1)
              * scale[None, :]).astype(compute_dtype)
    w2_mat = jnp.transpose(w2.reshape(C2, C1), (1, 0)).astype(compute_dtype)

    # Cast BEFORE building patches so the 9x-amplified im2col array is already
    # the narrow matmul dtype (halves the patches HBM traffic on the bf16 path).
    x_nhwc = jnp.transpose(x_nchw, (0, 2, 3, 1)).astype(compute_dtype)
    xp = jnp.pad(x_nhwc, ((0, 0), (1, 1), (1, 1), (0, 0)))   # pad=1 for 3x3
    # (B, H, W, 9*Cin): tap order (kh, kw), channel fastest — matches w1_mat.
    patches = jnp.concatenate(
        [xp[:, kh:kh + H, kw:kw + W, :] for kh in range(3) for kw in range(3)],
        axis=-1).reshape(M, K)
    # TODO(synk): for production head shapes, build the 9 taps inside the
    # kernel from an NHWC row block with halo (9 K=Cin accumulate matmuls) to
    # remove the remaining im2col HBM amplification entirely.

    patches_p = jnp.pad(patches, ((0, Mp - M), (0, Kp - K)))
    w1_p = jnp.pad(w1_mat, ((0, Kp - K), (0, C1p - C1)))
    b1_p = jnp.pad(bias1.astype(jnp.float32).reshape(1, C1),
                   ((0, 0), (0, C1p - C1)))
    w2_p = jnp.pad(w2_mat, ((0, C1p - C1), (0, C2p - C2)))
    b2_p = jnp.pad(b2.astype(jnp.float32).reshape(1, C2),
                   ((0, 0), (0, C2p - C2)))

    # Grid-invariant operands: single-buffer them (double-buffering a constant
    # index_map only burns VMEM) when the jax build supports it.
    const_kw = ({"pipeline_mode": pl.Buffered(1)}
                if single_buffer_weights else {})
    in_specs = [
        pl.BlockSpec((TM, Kp), lambda i: (i, 0)),            # streamed patches
        pl.BlockSpec((Kp, C1p), lambda i: (0, 0), **const_kw),
        pl.BlockSpec((1, C1p), lambda i: (0, 0), **const_kw),
        pl.BlockSpec((C1p, C2p), lambda i: (0, 0), **const_kw),
        pl.BlockSpec((1, C2p), lambda i: (0, 0), **const_kw),
    ]

    out = pl.pallas_call(
        yolo_head_kernel,
        out_shape=jax.ShapeDtypeStruct((Mp, C2p), out_dtype),
        grid_spec=pltpu.PrefetchScalarGridSpec(
            num_scalar_prefetch=0,
            grid=(Mp // TM,),
            in_specs=in_specs,
            out_specs=pl.BlockSpec((TM, C2p), lambda i: (i, 0)),
        ),
        compiler_params=pltpu.CompilerParams(
            dimension_semantics=("parallel",),
            vmem_limit_bytes=vmem_limit,
        ),
    )(patches_p, w1_p, b1_p, w2_p, b2_p)

    out = out[:M, :C2].reshape(B, H, W, C2)                  # NHWC
    if out_layout == "NCHW":
        out = jnp.transpose(out, (0, 3, 1, 2))
    return out


def yolo_head_forward(x_nchw, params, *, eps=1e-5, compute_dtype=jnp.bfloat16,
                      tile_m=1024, out_dtype=jnp.float32, out_layout="NCHW",
                      single_buffer_weights=None):
    """Fused YoloHead forward.  Defaults match PyTorch output (f32, NCHW)."""
    if single_buffer_weights is None:
        single_buffer_weights = _single_buffering_supported()
    return _yolo_head_impl(
        x_nchw, params, eps=eps, compute_dtype=compute_dtype, tile_m=tile_m,
        out_dtype=out_dtype, out_layout=out_layout,
        single_buffer_weights=bool(single_buffer_weights),
        min_grid_steps=_tensorcores_per_chip())


def ref_forward(x_nchw, params, eps=1e-5):
    """Pure-JAX reference reproducing the PyTorch forward exactly (f32)."""
    w1 = params["conv1_w"]
    y = jax.lax.conv_general_dilated(
        x_nchw, w1, window_strides=(1, 1), padding=((1, 1), (1, 1)),
        dimension_numbers=("NCHW", "OIHW", "NCHW"))
    scale = params["bn_gamma"] / jnp.sqrt(params["bn_var"] + eps)
    bias1 = params["bn_beta"] - params["bn_mean"] * scale
    y = y * scale[None, :, None, None] + bias1[None, :, None, None]
    y = jnp.where(y > 0, y, 0.1 * y)  # LeakyReLU(0.1)
    z = jax.lax.conv_general_dilated(
        y, params["conv2_w"], window_strides=(1, 1), padding=((0, 0), (0, 0)),
        dimension_numbers=("NCHW", "OIHW", "NCHW"))
    return z + params["conv2_b"][None, :, None, None]


if __name__ == "__main__":
    # Small shapes consistent with YoloHead(in_filters=4, filters_list=[32, 27]).
    B, Cin, H, W = 2, 4, 16, 16
    C1, C2 = 32, 27   # e.g. 3 anchors * (5 + 4 classes) = 27

    key = jax.random.PRNGKey(0)
    k = jax.random.split(key, 8)
    params = {
        "conv1_w": jax.random.normal(k[0], (C1, Cin, 3, 3), jnp.float32) * 0.1,
        "bn_gamma": jax.random.normal(k[1], (C1,), jnp.float32) * 0.1 + 1.0,
        "bn_beta": jax.random.normal(k[2], (C1,), jnp.float32) * 0.1,
        "bn_mean": jax.random.normal(k[3], (C1,), jnp.float32) * 0.1,
        "bn_var": jax.nn.softplus(jax.random.normal(k[4], (C1,), jnp.float32)) + 0.5,
        "conv2_w": jax.random.normal(k[5], (C2, C1, 1, 1), jnp.float32) * 0.1,
        "conv2_b": jax.random.normal(k[6], (C2,), jnp.float32) * 0.1,
    }
    x = jax.random.normal(k[7], (B, Cin, H, W), jnp.float32)

    ref = ref_forward(x, params)

    # Exact-math path (f32 matmuls): tight correctness check.
    out_f32 = jax.block_until_ready(
        yolo_head_forward(x, params, compute_dtype=jnp.float32))
    np.testing.assert_allclose(np.asarray(out_f32), np.asarray(ref),
                               rtol=1e-4, atol=1e-4)

    # Fast path (bf16 matmul inputs, f32 accumulation): looser smoke check.
    out_bf16 = jax.block_until_ready(yolo_head_forward(x, params))
    np.testing.assert_allclose(np.asarray(out_bf16), np.asarray(ref),
                               rtol=5e-2, atol=8e-2)

    # Reduced-writeback variant (bf16 NHWC output) — shape smoke test only.
    out_nhwc = jax.block_until_ready(
        yolo_head_forward(x, params, out_dtype=jnp.bfloat16,
                          out_layout="NHWC"))
    assert out_nhwc.shape == (B, H, W, C2)

    assert out_f32.shape == (B, C2, H, W)
    assert out_bf16.shape == (B, C2, H, W)
    print("KERNEL_OK")
</pallas_src>

<mosaic_0001>
module attributes {stable_mosaic.version = 11 : i64} {
  func.func @_probe_copy_kernel(%arg0: i32, %arg1: memref<8x128xf32, #tpu.memory_space<vmem>>, %arg2: memref<8x128xf32, #tpu.memory_space<vmem>>) attributes {dimension_semantics = [#tpu.dimension_semantics<arbitrary>], iteration_bounds = array<i64: 1>, scalar_prefetch = 0 : i64, scratch_operands = 0 : i64, tpu.core_type = #tpu.core_type<tc>, window_params = [{pipeline_mode = #tpu.pipeline_mode<synchronous>, transform_indices = @transform_0, window_bounds = array<i64: 8, 128>}, {pipeline_mode = #tpu.pipeline_mode<synchronous>, transform_indices = @transform_1, window_bounds = array<i64: 8, 128>}]} {
    %c0 = arith.constant 0 : index
    %c0_0 = arith.constant 0 : index
    %0 = vector.load %arg1[%c0, %c0_0] : memref<8x128xf32, #tpu.memory_space<vmem>>, vector<8x128xf32>
    %c0_1 = arith.constant 0 : index
    %c0_2 = arith.constant 0 : index
    %1 = vector.load %arg2[%c0_1, %c0_2] : memref<8x128xf32, #tpu.memory_space<vmem>>, vector<8x128xf32>
    tpu.vector_store %arg2[%c0_1, %c0_2], %0 {strides = array<i32>} : memref<8x128xf32, #tpu.memory_space<vmem>>, vector<8x128xf32>,
    return
  }
  func.func @transform_0(%arg0: i32) -> (i32, i32) {
    %c0_i32 = arith.constant 0 : i32
    %c0_i32_0 = arith.constant 0 : i32
    %c0_i32_1 = arith.constant 0 : i32
    return %c0_i32, %c0_i32_0 : i32, i32
  }
  func.func @transform_1(%arg0: i32) -> (i32, i32) {
    %c0_i32 = arith.constant 0 : i32
    %c0_i32_0 = arith.constant 0 : i32
    %c0_i32_1 = arith.constant 0 : i32
    return %c0_i32, %c0_i32_0 : i32, i32
  }
}

module attributes {stable_mosaic.version = 11 : i64} {
  func.func @yolo_head_kernel(%arg0: i32, %arg1: memref<512x128xf32, #tpu.memory_space<vmem>>, %arg2: memref<128x128xf32, #tpu.memory_space<vmem>>, %arg3: memref<1x128xf32, #tpu.memory_space<vmem>>, %arg4: memref<128x128xf32, #tpu.memory_space<vmem>>, %arg5: memref<1x128xf32, #tpu.memory_space<vmem>>, %arg6: memref<512x128xf32, #tpu.memory_space<vmem>>) attributes {dimension_semantics = [#tpu.dimension_semantics<parallel>], iteration_bounds = array<i64: 1>, scalar_prefetch = 0 : i64, scratch_operands = 0 : i64, tpu.core_type = #tpu.core_type<tc>, window_params = [{transform_indices = @transform_0, window_bounds = array<i64: 512, 128>}, {pipeline_mode = #tpu.pipeline_mode<synchronous>, transform_indices = @transform_1, window_bounds = array<i64: 128, 128>}, {pipeline_mode = #tpu.pipeline_mode<synchronous>, transform_indices = @transform_2, window_bounds = array<i64: 1, 128>}, {pipeline_mode = #tpu.pipeline_mode<synchronous>, transform_indices = @transform_3, window_bounds = array<i64: 128, 128>}, {pipeline_mode = #tpu.pipeline_mode<synchronous>, transform_indices = @transform_4, window_bounds = array<i64: 1, 128>}, {transform_indices = @transform_5, window_bounds = array<i64: 512, 128>}]} {
    %c0 = arith.constant 0 : index
    %c0_0 = arith.constant 0 : index
    %0 = vector.load %arg1[%c0, %c0_0] : memref<512x128xf32, #tpu.memory_space<vmem>>, vector<512x128xf32>
    %c0_1 = arith.constant 0 : index
    %c0_2 = arith.constant 0 : index
    %1 = vector.load %arg2[%c0_1, %c0_2] : memref<128x128xf32, #tpu.memory_space<vmem>>, vector<128x128xf32>
    %cst = arith.constant dense<0.000000e+00> : vector<512x128xf32>
    %2 = tpu.matmul %0, %1, %cst {dimension_numbers = #tpu.dot_dimension_numbers<[1], [0], [0], [1], [0, 0, 1, 1], [], []>} : vector<512x128xf32>, vector<128x128xf32>, vector<512x128xf32> -> vector<512x128xf32>
    %c0_3 = arith.constant 0 : index
    %c0_4 = arith.constant 0 : index
    %3 = vector.load %arg3[%c0_3, %c0_4] : memref<1x128xf32, #tpu.memory_space<vmem>>, vector<1x128xf32>
    %4 = vector.broadcast %3 : vector<1x128xf32> to vector<512x128xf32>
    %5 = arith.addf %2, %4 : vector<512x128xf32>
    %cst_5 = arith.constant 1.000000e-01 : f32
    %6 = vector.broadcast %cst_5 : f32 to vector<512x128xf32>
    %7 = arith.mulf %6, %5 : vector<512x128xf32>
    %8 = arith.maximumf %5, %7 : vector<512x128xf32>
    %c0_6 = arith.constant 0 : index
    %c0_7 = arith.constant 0 : index
    %9 = vector.load %arg4[%c0_6, %c0_7] : memref<128x128xf32, #tpu.memory_space<vmem>>, vector<128x128xf32>
    %cst_8 = arith.constant dense<0.000000e+00> : vector<512x128xf32>
    %10 = tpu.matmul %8, %9, %cst_8 {dimension_numbers = #tpu.dot_dimension_numbers<[1], [0], [0], [1], [0, 0, 1, 1], [], []>} : vector<512x128xf32>, vector<128x128xf32>, vector<512x128xf32> -> vector<512x128xf32>
    %c0_9 = arith.constant 0 : index
    %c0_10 = arith.constant 0 : index
    %11 = vector.load %arg5[%c0_9, %c0_10] : memref<1x128xf32, #tpu.memory_space<vmem>>, vector<1x128xf32>
    %12 = vector.broadcast %11 : vector<1x128xf32> to vector<512x128xf32>
    %13 = arith.addf %10, %12 : vector<512x128xf32>
    %c0_11 = arith.constant 0 : index
    %c0_12 = arith.constant 0 : index
    %14 = vector.load %arg6[%c0_11, %c0_12] : memref<512x128xf32, #tpu.memory_space<vmem>>, vector<512x128xf32>
    tpu.vector_store %arg6[%c0_11, %c0_12], %13 {strides = array<i32>} : memref<512x128xf32, #tpu.memory_space<vmem>>, vector<512x128xf32>,
    return
  }
  func.func @transform_0(%arg0: i32) -> (i32, i32) {
    %c0_i32 = arith.constant 0 : i32
    %c0_i32_0 = arith.constant 0 : i32
    return %arg0, %c0_i32 : i32, i32
  }
  func.func @transform_1(%arg0: i32) -> (i32, i32) {
    %c0_i32 = arith.constant 0 : i32
    %c0_i32_0 = arith.constant 0 : i32
    %c0_i32_1 = arith.constant 0 : i32
    return %c0_i32, %c0_i32_0 : i32, i32
  }
  func.func @transform_2(%arg0: i32) -> (i32, i32) {
    %c0_i32 = arith.constant 0 : i32
    %c0_i32_0 = arith.constant 0 : i32
    %c0_i32_1 = arith.constant 0 : i32
    return %c0_i32, %c0_i32_0 : i32, i32
  }
  func.func @transform_3(%arg0: i32) -> (i32, i32) {
    %c0_i32 = arith.constant 0 : i32
    %c0_i32_0 = arith.constant 0 : i32
    %c0_i32_1 = arith.constant 0 : i32
    return %c0_i32, %c0_i32_0 : i32, i32
  }
  func.func @transform_4(%arg0: i32) -> (i32, i32) {
    %c0_i32 = arith.constant 0 : i32
    %c0_i32_0 = arith.constant 0 : i32
    %c0_i32_1 = arith.constant 0 : i32
    return %c0_i32, %c0_i32_0 : i32, i32
  }
  func.func @transform_5(%arg0: i32) -> (i32, i32) {
    %c0_i32 = arith.constant 0 : i32
    %c0_i32_0 = arith.constant 0 : i32
    return %arg0, %c0_i32 : i32, i32
  }
}

</mosaic_0001>

<llo_original>
// kernel: tpu_custom_call.1
$region0: #{tpu_custom_call.1}
  #allocation0 [shape = 'u32[]', space=smem, size = 0x4, offset = 0x4, fixed_abs, tag = 'smem constant byte address 0x4 - core index']
  #allocation1 [shape = 'u32[144,128]{1,0:T(1,128)}', space=vmem, size = 0x12000, scoped, tag = 'internal scratch']
  %s0 = inlined_call_operand.hbm [shape: f32[8,128], index: 0, kind: input, shape index: {}]
  %s1 = inlined_call_operand.hbm [shape: f32[8,128], index: 1, kind: output, shape index: {}]
  %s2 = sld [smem:[#allocation0]]
  $region18: #{tpu_custom_call.1} parent=0
    _
  %s4 = ssub.s32 1, %s2
  %s5 = scalar_select 0, %s4, %s2
  $region1: #{tpu_custom_call.1} parent=0
    #allocation2 [shape = 'u8[4096]{0}', space=vmem, size = 0x1000, scoped, tag = 'input window, operand 0, single buffered']
    #allocation3 [shape = 's32[1]{0}', space=sflag, size = 0x4, scoped, tag = 'scoped memory for tpu_custom_call.1']
    #allocation4 [shape = 's32[1]{0}', space=sflag, size = 0x4, scoped, tag = 'scoped memory for tpu_custom_call.1']
    #allocation5 [shape = 'u8[4096]{0}', space=vmem, size = 0x1000, scoped, tag = 'output window, operand 0, single buffered']
    %6 = vsyncpa [#allocation3], 0
    %7 = vsyncpa [#allocation4], 0
    // Predicated region
    $region2: #{tpu_custom_call.1} parent=1 // pred_check
      _
    $region3: #{tpu_custom_call.1} parent=1 // pred_check_branch
      %9 = sbr.rel (0) target = $region5
    $region4: #{tpu_custom_call.1} parent=1 // pred_region
      %s11 = ssub.s32 128, 128
      %12 = vsyncadd [#allocation3], %s11
      %s14 = sshll.u32 [#allocation2], 4
      %s15 = int_to_ptr.vmem [resolvable:$true] %s14
      %17 = dma.hbm_to_vmem [thread:$0]  %s0, 128, %s15, [#allocation3]
    $region5: #{tpu_custom_call.1} parent=1 // pred_fallthru
      _
    // Predicated region
    $region6: #{tpu_custom_call.1} parent=1 // pred_check
      _
    $region7: #{tpu_custom_call.1} parent=1 // pred_check_branch
      %19 = sbr.rel (0) target = $region9
    $region8: #{tpu_custom_call.1} parent=1 // pred_region
      %20 = dma.done [#allocation3], 128
    $region9: #{tpu_custom_call.1} parent=1 // pred_fallthru
      _
    %v21 = vld [vmem:[#allocation2] sm:$0xff]
    %22 = vst [vmem:[#allocation5] sm:$0xff] %v21
    // Predicated region
    $region10: #{tpu_custom_call.1} parent=1 // pred_check
      _
    $region11: #{tpu_custom_call.1} parent=1 // pred_check_branch
      %24 = sbr.rel (0) target = $region13
    $region12: #{tpu_custom_call.1} parent=1 // pred_region
      %s26 = ssub.s32 128, 128
      %27 = vsyncadd [#allocation4], %s26
      %s29 = sshll.u32 [#allocation5], 4
      %s30 = int_to_ptr.vmem [resolvable:$true] %s29
      %32 = dma.vmem_to_hbm [thread:$0]  %s30, 128, %s1, [#allocation4]
    $region13: #{tpu_custom_call.1} parent=1 // pred_fallthru
      _
    // Predicated region
    $region14: #{tpu_custom_call.1} parent=1 // pred_check
      _
    $region15: #{tpu_custom_call.1} parent=1 // pred_check_branch
      %34 = sbr.rel (0) target = $region17
    $region16: #{tpu_custom_call.1} parent=1 // pred_region
      %35 = dma.done [#allocation4], 128
    $region17: #{tpu_custom_call.1} parent=1 // pred_fallthru
      _
    %36 = vsyncpa [#allocation3], 1
    %37 = vsyncpa [#allocation4], 1

// kernel: _yolo_head_impl.1
$region0: #{_yolo_head_impl.1}
  #allocation0 [shape = 'u32[]', space=smem, size = 0x4, offset = 0x4, fixed_abs, tag = 'smem constant byte address 0x4 - core index']
  #allocation1 [shape = 'u32[144,128]{1,0:T(1,128)}', space=vmem, size = 0x12000, scoped, tag = 'internal scratch']
  %s0 = inlined_call_operand.vmem [shape: f32[512,128], index: 0, kind: input, shape index: {}]
  %s1 = inlined_call_operand.vmem [shape: f32[128,128], index: 1, kind: input, shape index: {}]
  %s2 = inlined_call_operand.vmem [shape: f32[1,128], index: 2, kind: input, shape index: {}]
  %s3 = inlined_call_operand.vmem [shape: f32[128,128], index: 3, kind: input, shape index: {}]
  %s4 = inlined_call_operand.vmem [shape: f32[1,128], index: 4, kind: input, shape index: {}]
  %s5 = inlined_call_operand.hbm [shape: f32[512,128], index: 5, kind: output, shape index: {}]
  %s6 = sld [smem:[#allocation0]]
  $region30: #{_yolo_head_impl.1} parent=0
    _
  %s8 = ssub.s32 1, %s6
  %s9 = scalar_select 0, %s8, %s6
  $region1: #{_yolo_head_impl.1} parent=0
    #allocation2 [shape = 'u8[262144]{0}', space=vmem, size = 0x40000, scoped, tag = 'output window, operand 0, single buffered']
    #allocation3 [shape = 's32[1]{0}', space=sflag, size = 0x4, scoped, tag = 'scoped memory for _yolo_head_impl.1']
    %10 = vsyncpa [#allocation3], 0
    // Predicated region
    $region2: #{_yolo_head_impl.1} parent=1 // pred_check
      _
    $region3: #{_yolo_head_impl.1} parent=1 // pred_check_branch
      %12 = sbr.rel (0) target = $region5
    $region4: #{_yolo_head_impl.1} parent=1 // pred_region
      _
    $region5: #{_yolo_head_impl.1} parent=1 // pred_fallthru
      _
    // Predicated region
    $region6: #{_yolo_head_impl.1} parent=1 // pred_check
      _
    $region7: #{_yolo_head_impl.1} parent=1 // pred_check_branch
      %14 = sbr.rel (0) target = $region9
    $region8: #{_yolo_head_impl.1} parent=1 // pred_region
      _
    $region9: #{_yolo_head_impl.1} parent=1 // pred_fallthru
      _
    // Predicated region
    $region10: #{_yolo_head_impl.1} parent=1 // pred_check
      _
    $region11: #{_yolo_head_impl.1} parent=1 // pred_check_branch
      %16 = sbr.rel (0) target = $region13
    $region12: #{_yolo_head_impl.1} parent=1 // pred_region
      _
    $region13: #{_yolo_head_impl.1} parent=1 // pred_fallthru
      _
    // Predicated region
    $region14: #{_yolo_head_impl.1} parent=1 // pred_check
      _
    $region15: #{_yolo_head_impl.1} parent=1 // pred_check_branch
      %18 = sbr.rel (0) target = $region17
    $region16: #{_yolo_head_impl.1} parent=1 // pred_region
      _
    $region17: #{_yolo_head_impl.1} parent=1 // pred_fallthru
      _
    // Predicated region
    $region18: #{_yolo_head_impl.1} parent=1 // pred_check
      _
    $region19: #{_yolo_head_impl.1} parent=1 // pred_check_branch
      %20 = sbr.rel (0) target = $region21
    $region20: #{_yolo_head_impl.1} parent=1 // pred_region
      _
    $region21: #{_yolo_head_impl.1} parent=1 // pred_fallthru
      _
    %v21 = vld [vmem:[%s0] sm:$0xff]
    %v22 = vld [vmem:[%s0 + $0x8] sm:$0xff]
    %v23 = vld [vmem:[%s0 + $0x10] sm:$0xff]
    %v24 = vld [vmem:[%s0 + $0x18] sm:$0xff]
    %v25 = vld [vmem:[%s0 + $0x20] sm:$0xff]
    %v26 = vld [vmem:[%s0 + $0x28] sm:$0xff]
    %v27 = vld [vmem:[%s0 + $0x30] sm:$0xff]
    %v28 = vld [vmem:[%s0 + $0x38] sm:$0xff]
    %v29 = vld [vmem:[%s0 + $0x40] sm:$0xff]
    %v30 = vld [vmem:[%s0 + $0x48] sm:$0xff]
    %v31 = vld [vmem:[%s0 + $0x50] sm:$0xff]
    %v32 = vld [vmem:[%s0 + $0x58] sm:$0xff]
    %v33 = vld [vmem:[%s0 + $0x60] sm:$0xff]
    %v34 = vld [vmem:[%s0 + $0x68] sm:$0xff]
    %v35 = vld [vmem:[%s0 + $0x70] sm:$0xff]
    %v36 = vld [vmem:[%s0 + $0x78] sm:$0xff]
    %v37 = vld [vmem:[%s0 + $0x80] sm:$0xff]
    %v38 = vld [vmem:[%s0 + $0x88] sm:$0xff]
    %v39 = vld [vmem:[%s0 + $0x90] sm:$0xff]
    %v40 = vld [vmem:[%s0 + $0x98] sm:$0xff]
    %v41 = vld [vmem:[%s0 + $0xa0] sm:$0xff]
    %v42 = vld [vmem:[%s0 + $0xa8] sm:$0xff]
    %v43 = vld [vmem:[%s0 + $0xb0] sm:$0xff]
    %v44 = vld [vmem:[%s0 + $0xb8] sm:$0xff]
    %v45 = vld [vmem:[%s0 + $0xc0] sm:$0xff]
    %v46 = vld [vmem:[%s0 + $0xc8] sm:$0xff]
    %v47 = vld [vmem:[%s0 + $0xd0] sm:$0xff]
    %v48 = vld [vmem:[%s0 + $0xd8] sm:$0xff]
    %v49 = vld [vmem:[%s0 + $0xe0] sm:$0xff]
    %v50 = vld [vmem:[%s0 + $0xe8] sm:$0xff]
    %v51 = vld [vmem:[%s0 + $0xf0] sm:$0xff]
    %v52 = vld [vmem:[%s0 + $0xf8] sm:$0xff]
    %v53 = vld [vmem:[%s0 + $0x100] sm:$0xff]
    %v54 = vld [vmem:[%s0 + $0x108] sm:$0xff]
    %v55 = vld [vmem:[%s0 + $0x110] sm:$0xff]
    %v56 = vld [vmem:[%s0 + $0x118] sm:$0xff]
    %v57 = vld [vmem:[%s0 + $0x120] sm:$0xff]
    %v58 = vld [vmem:[%s0 + $0x128] sm:$0xff]
    %v59 = vld [vmem:[%s0 + $0x130] sm:$0xff]
    %v60 = vld [vmem:[%s0 + $0x138] sm:$0xff]
    %v61 = vld [vmem:[%s0 + $0x140] sm:$0xff]
    %v62 = vld [vmem:[%s0 + $0x148] sm:$0xff]
    %v63 = vld [vmem:[%s0 + $0x150] sm:$0xff]
    %v64 = vld [vmem:[%s0 + $0x158] sm:$0xff]
    %v65 = vld [vmem:[%s0 + $0x160] sm:$0xff]
    %v66 = vld [vmem:[%s0 + $0x168] sm:$0xff]
    %v67 = vld [vmem:[%s0 + $0x170] sm:$0xff]
    %v68 = vld [vmem:[%s0 + $0x178] sm:$0xff]
    %v69 = vld [vmem:[%s0 + $0x180] sm:$0xff]
    %v70 = vld [vmem:[%s0 + $0x188] sm:$0xff]
    %v71 = vld [vmem:[%s0 + $0x190] sm:$0xff]
    %v72 = vld [vmem:[%s0 + $0x198] sm:$0xff]
    %v73 = vld [vmem:[%s0 + $0x1a0] sm:$0xff]
    %v74 = vld [vmem:[%s0 + $0x1a8] sm:$0xff]
    %v75 = vld [vmem:[%s0 + $0x1b0] sm:$0xff]
    %v76 = vld [vmem:[%s0 + $0x1b8] sm:$0xff]
    %v77 = vld [vmem:[%s0 + $0x1c0] sm:$0xff]
    %v78 = vld [vmem:[%s0 + $0x1c8] sm:$0xff]
    %v79 = vld [vmem:[%s0 + $0x1d0] sm:$0xff]
    %v80 = vld [vmem:[%s0 + $0x1d8] sm:$0xff]
    %v81 = vld [vmem:[%s0 + $0x1e0] sm:$0xff]
    %v82 = vld [vmem:[%s0 + $0x1e8] sm:$0xff]
    %v83 = vld [vmem:[%s0 + $0x1f0] sm:$0xff]
    %v84 = vld [vmem:[%s0 + $0x1f8] sm:$0xff]
    %v85 = vld [vmem:[%s1] sm:$0xff]
    %v86 = vld [vmem:[%s1 + $0x8] sm:$0xff]
    %v87 = vld [vmem:[%s1 + $0x10] sm:$0xff]
    %v88 = vld [vmem:[%s1 + $0x18] sm:$0xff]
    %v89 = vld [vmem:[%s1 + $0x20] sm:$0xff]
    %v90 = vld [vmem:[%s1 + $0x28] sm:$0xff]
    %v91 = vld [vmem:[%s1 + $0x30] sm:$0xff]
    %v92 = vld [vmem:[%s1 + $0x38] sm:$0xff]
    %v93 = vld [vmem:[%s1 + $0x40] sm:$0xff]
    %v94 = vld [vmem:[%s1 + $0x48] sm:$0xff]
    %v95 = vld [vmem:[%s1 + $0x50] sm:$0xff]
    %v96 = vld [vmem:[%s1 + $0x58] sm:$0xff]
    %v97 = vld [vmem:[%s1 + $0x60] sm:$0xff]
    %v98 = vld [vmem:[%s1 + $0x68] sm:$0xff]
    %v99 = vld [vmem:[%s1 + $0x70] sm:$0xff]
    %v100 = vld [vmem:[%s1 + $0x78] sm:$0xff]
    %v101 = vld [vmem:[%s2] sm:$0x1]
    %v103 = vlaneseq
    %v104 = vshrl.u32 %v103, 7
    %v105 = vsub.s32 0, %v104
    %v106 = vrot.slane %v101, %v105
    %108 = vmatprep.subr.mxu0 0.0
    %109 = vmatpush1.msra.mxu0 %v85
    %110 = vmatprep.subr.mxu0 0.0
    %111 = vmatpush1.msra.mxu0 %v86
    %112 = vmatprep.subr.mxu0 0.0
    %113 = vmatpush1.msra.mxu0 %v87
    %114 = vmatprep.subr.mxu0 0.0
    %115 = vmatpush1.msra.mxu0 %v88
    %116 = vmatprep.subr.mxu0 0.0
    %117 = vmatpush1.msra.mxu0 %v89
    %118 = vmatprep.subr.mxu0 0.0
    %119 = vmatpush1.msra.mxu0 %v90
    %120 = vmatprep.subr.mxu0 0.0
    %121 = vmatpush1.msra.mxu0 %v91
    %122 = vmatprep.subr.mxu0 0.0
    %123 = vmatpush1.msra.mxu0 %v92
    %124 = vmatprep.subr.mxu0 0.0
    %125 = vmatpush1.msra.mxu0 %v93
    %126 = vmatprep.subr.mxu0 0.0
    %127 = vmatpush1.msra.mxu0 %v94
    %128 = vmatprep.subr.mxu0 0.0
    %129 = vmatpush1.msra.mxu0 %v95
    %130 = vmatprep.subr.mxu0 0.0
    %131 = vmatpush1.msra.mxu0 %v96
    %132 = vmatprep.subr.mxu0 0.0
    %133 = vmatpush1.msra.mxu0 %v97
    %134 = vmatprep.subr.mxu0 0.0
    %135 = vmatpush1.msra.mxu0 %v98
    %136 = vmatprep.subr.mxu0 0.0
    %137 = vmatpush1.msra.mxu0 %v99
    %138 = vmatprep.subr.mxu0 0.0
    %139 = vmatpush1.msra.mxu0 %v100
    %140 = vmatprep.subr.mxu0 0.0
    %141 = vmatpush1.msra.mxu0 0.0
    %142 = vmatprep.subr.mxu0 0.0
    %143 = vmatpush1.msra.mxu0 0.0
    %144 = vmatprep.subr.mxu0 0.0
    %145 = vmatpush1.msra.mxu0 0.0
    %146 = vmatprep.subr.mxu0 0.0
    %147 = vmatpush1.msra.mxu0 0.0
    %148 = vmatprep.subr.mxu0 0.0
    %149 = vmatpush1.msra.mxu0 0.0
    %150 = vmatprep.subr.mxu0 0.0
    %151 = vmatpush1.msra.mxu0 0.0
    %152 = vmatprep.subr.mxu0 0.0
    %153 = vmatpush1.msra.mxu0 0.0
    %154 = vmatprep.subr.mxu0 0.0
    %155 = vmatpush1.msra.mxu0 0.0
    %156 = vmatprep.subr.mxu0 0.0
    %157 = vmatpush1.msra.mxu0 0.0
    %158 = vmatprep.subr.mxu0 0.0
    %159 = vmatpush1.msra.mxu0 0.0
    %160 = vmatprep.subr.mxu0 0.0
    %161 = vmatpush1.msra.mxu0 0.0
    %162 = vmatprep.subr.mxu0 0.0
    %163 = vmatpush1.msra.mxu0 0.0
    %164 = vmatprep.subr.mxu0 0.0
    %165 = vmatpush1.msra.mxu0 0.0
    %166 = vmatprep.subr.mxu0 0.0
    %167 = vmatpush1.msra.mxu0 0.0
    %168 = vmatprep.subr.mxu0 0.0
    %169 = vmatpush1.msra.mxu0 0.0
    %170 = vmatprep.subr.mxu0 0.0
    %171 = vmatpush1.msra.mxu0 0.0
    %172 = vmatprep.mubr.f32.mxu0 0.0
    %173 = vmatmul.mubr.f32.gmra.mrb[0].mxu0 %v21
    %v174 = vpop.f32.mrb[0].mxu0
    %v175 = vadd.f32 %v106, %v174
    %v176 = vpop.f32.mrb[0].mxu0
    %177 = vmatprep.mubr.f32.mxu0 0.0
    %178 = vmatmul.mubr.f32.gmra.mrb[0].mxu0 %v22
    %v179 = vpop.f32.mrb[0].mxu0
    %v180 = vadd.f32 %v106, %v179
    %v181 = vpop.f32.mrb[0].mxu0
    %182 = vmatprep.mubr.f32.mxu0 0.0
    %183 = vmatmul.mubr.f32.gmra.mrb[0].mxu0 %v23
    %v184 = vpop.f32.mrb[0].mxu0
    %v185 = vadd.f32 %v106, %v184
    %v186 = vpop.f32.mrb[0].mxu0
    %187 = vmatprep.mubr.f32.mxu0 0.0
    %188 = vmatmul.mubr.f32.gmra.mrb[0].mxu0 %v24
    %v189 = vpop.f32.mrb[0].mxu0
    %v190 = vadd.f32 %v106, %v189
    %v191 = vpop.f32.mrb[0].mxu0
    %192 = vmatprep.mubr.f32.mxu0 0.0
    %193 = vmatmul.mubr.f32.gmra.mrb[0].mxu0 %v25
    %v194 = vpop.f32.mrb[0].mxu0
    %v195 = vadd.f32 %v106, %v194
    %v196 = vpop.f32.mrb[0].mxu0
    %197 = vmatprep.mubr.f32.mxu0 0.0
    %198 = vmatmul.mubr.f32.gmra.mrb[0].mxu0 %v26
    %v199 = vpop.f32.mrb[0].mxu0
    %v200 = vadd.f32 %v106, %v199
    %v201 = vpop.f32.mrb[0].mxu0
    %202 = vmatprep.mubr.f32.mxu0 0.0
    %203 = vmatmul.mubr.f32.gmra.mrb[0].mxu0 %v27
    %v204 = vpop.f32.mrb[0].mxu0
    %v205 = vadd.f32 %v106, %v204
    %v206 = vpop.f32.mrb[0].mxu0
    %207 = vmatprep.mubr.f32.mxu0 0.0
    %208 = vmatmul.mubr.f32.gmra.mrb[0].mxu0 %v28
    %v209 = vpop.f32.mrb[0].mxu0
    %v210 = vadd.f32 %v106, %v209
    %v211 = vpop.f32.mrb[0].mxu0
    %212 = vmatprep.mubr.f32.mxu0 0.0
    %213 = vmatmul.mubr.f32.gmra.mrb[0].mxu0 %v29
    %v214 = vpop.f32.mrb[0].mxu0
    %v215 = vadd.f32 %v106, %v214
    %v216 = vpop.f32.mrb[0].mxu0
    %217 = vmatprep.mubr.f32.mxu0 0.0
    %218 = vmatmul.mubr.f32.gmra.mrb[0].mxu0 %v30
    %v219 = vpop.f32.mrb[0].mxu0
    %v220 = vadd.f32 %v106, %v219
    %v221 = vpop.f32.mrb[0].mxu0
    %222 = vmatprep.mubr.f32.mxu0 0.0
    %223 = vmatmul.mubr.f32.gmra.mrb[0].mxu0 %v31
    %v224 = vpop.f32.mrb[0].mxu0
    %v225 = vadd.f32 %v106, %v224
    %v226 = vpop.f32.mrb[0].mxu0
    %227 = vmatprep.mubr.f32.mxu0 0.0
    %228 = vmatmul.mubr.f32.gmra.mrb[0].mxu0 %v32
    %v229 = vpop.f32.mrb[0].mxu0
    %v230 = vadd.f32 %v106, %v229
    %v231 = vpop.f32.mrb[0].mxu0
    %232 = vmatprep.mubr.f32.mxu0 0.0
    %233 = vmatmul.mubr.f32.gmra.mrb[0].mxu0 %v33
    %v234 = vpop.f32.mrb[0].mxu0
    %v235 = vadd.f32 %v106, %v234
    %v236 = vpop.f32.mrb[0].mxu0
    %237 = vmatprep.mubr.f32.mxu0 0.0
    %238 = vmatmul.mubr.f32.gmra.mrb[0].mxu0 %v34
    %v239 = vpop.f32.mrb[0].mxu0
    %v240 = vadd.f32 %v106, %v239
    %v241 = vpop.f32.mrb[0].mxu0
    %242 = vmatprep.mubr.f32.mxu0 0.0
    %243 = vmatmul.mubr.f32.gmra.mrb[0].mxu0 %v35
    %v244 = vpop.f32.mrb[0].mxu0
    %v245 = vadd.f32 %v106, %v244
    %v246 = vpop.f32.mrb[0].mxu0
    %247 = vmatprep.mubr.f32.mxu0 0.0
    %248 = vmatmul.mubr.f32.gmra.mrb[0].mxu0 %v36
    %v249 = vpop.f32.mrb[0].mxu0
    %v250 = vadd.f32 %v106, %v249
    %v251 = vpop.f32.mrb[0].mxu0
    %252 = vmatprep.mubr.f32.mxu0 0.0
    %253 = vmatmul.mubr.f32.gmra.mrb[0].mxu0 %v37
    %v254 = vpop.f32.mrb[0].mxu0
    %v255 = vadd.f32 %v106, %v254
    %v256 = vpop.f32.mrb[0].mxu0
    %257 = vmatprep.mubr.f32.mxu0 0.0
    %258 = vmatmul.mubr.f32.gmra.mrb[0].mxu0 %v38
    %v259 = vpop.f32.mrb[0].mxu0
    %v260 = vadd.f32 %v106, %v259
    %v261 = vpop.f32.mrb[0].mxu0
    %262 = vmatprep.mubr.f32.mxu0 0.0
    %263 = vmatmul.mubr.f32.gmra.mrb[0].mxu0 %v39
    %v264 = vpop.f32.mrb[0].mxu0
    %v265 = vadd.f32 %v106, %v264
    %v266 = vpop.f32.mrb[0].mxu0
    %267 = vmatprep.mubr.f32.mxu0 0.0
    %268 = vmatmul.mubr.f32.gmra.mrb[0].mxu0 %v40
    %v269 = vpop.f32.mrb[0].mxu0
    %v270 = vadd.f32 %v106, %v269
    %v271 = vpop.f32.mrb[0].mxu0
    %272 = vmatprep.mubr.f32.mxu0 0.0
    %273 = vmatmul.mubr.f32.gmra.mrb[0].mxu0 %v41
    %v274 = vpop.f32.mrb[0].mxu0
    %v275 = vadd.f32 %v106, %v274
    %v276 = vpop.f32.mrb[0].mxu0
    %277 = vmatprep.mubr.f32.mxu0 0.0
    %278 = vmatmul.mubr.f32.gmra.mrb[0].mxu0 %v42
    %v279 = vpop.f32.mrb[0].mxu0
    %v280 = vadd.f32 %v106, %v279
    %v281 = vpop.f32.mrb[0].mxu0
    %282 = vmatprep.mubr.f32.mxu0 0.0
    %283 = vmatmul.mubr.f32.gmra.mrb[0].mxu0 %v43
    %v284 = vpop.f32.mrb[0].mxu0
    %v285 = vadd.f32 %v106, %v284
    %v286 = vpop.f32.mrb[0].mxu0
    %287 = vmatprep.mubr.f32.mxu0 0.0
    %288 = vmatmul.mubr.f32.gmra.mrb[0].mxu0 %v44
    %v289 = vpop.f32.mrb[0].mxu0
    %v290 = vadd.f32 %v106, %v289
    %v291 = vpop.f32.mrb[0].mxu0
    %292 = vmatprep.mubr.f32.mxu0 0.0
    %293 = vmatmul.mubr.f32.gmra.mrb[0].mxu0 %v45
    %v294 = vpop.f32.mrb[0].mxu0
    %v295 = vadd.f32 %v106, %v294
    %v296 = vpop.f32.mrb[0].mxu0
    %297 = vmatprep.mubr.f32.mxu0 0.0
    %298 = vmatmul.mubr.f32.gmra.mrb[0].mxu0 %v46
    %v299 = vpop.f32.mrb[0].mxu0
    %v300 = vadd.f32 %v106, %v299
    %v301 = vpop.f32.mrb[0].mxu0
    %302 = vmatprep.mubr.f32.mxu0 0.0
    %303 = vmatmul.mubr.f32.gmra.mrb[0].mxu0 %v47
    %v304 = vpop.f32.mrb[0].mxu0
    %v305 = vadd.f32 %v106, %v304
    %v306 = vpop.f32.mrb[0].mxu0
    %307 = vmatprep.mubr.f32.mxu0 0.0
    %308 = vmatmul.mubr.f32.gmra.mrb[0].mxu0 %v48
    %v309 = vpop.f32.mrb[0].mxu0
    %v310 = vadd.f32 %v106, %v309
    %v311 = vpop.f32.mrb[0].mxu0
    %312 = vmatprep.mubr.f32.mxu0 0.0
    %313 = vmatmul.mubr.f32.gmra.mrb[0].mxu0 %v49
    %v314 = vpop.f32.mrb[0].mxu0
    %v315 = vadd.f32 %v106, %v314
    %v316 = vpop.f32.mrb[0].mxu0
    %317 = vmatprep.mubr.f32.mxu0 0.0
    %318 = vmatmul.mubr.f32.gmra.mrb[0].mxu0 %v50
    %v319 = vpop.f32.mrb[0].mxu0
    %v320 = vadd.f32 %v106, %v319
    %v321 = vpop.f32.mrb[0].mxu0
    %322 = vmatprep.mubr.f32.mxu0 0.0
    %323 = vmatmul.mubr.f32.gmra.mrb[0].mxu0 %v51
    %v324 = vpop.f32.mrb[0].mxu0
    %v325 = vadd.f32 %v106, %v324
    %v326 = vpop.f32.mrb[0].mxu0
    %327 = vmatprep.mubr.f32.mxu0 0.0
    %328 = vmatmul.mubr.f32.gmra.mrb[0].mxu0 %v52
    %v329 = vpop.f32.mrb[0].mxu0
    %v330 = vadd.f32 %v106, %v329
    %v331 = vpop.f32.mrb[0].mxu0
    %332 = vmatprep.mubr.f32.mxu0 0.0
    %333 = vmatmul.mubr.f32.gmra.mrb[0].mxu0 %v53
    %v334 = vpop.f32.mrb[0].mxu0
    %v335 = vadd.f32 %v106, %v334
    %v336 = vpop.f32.mrb[0].mxu0
    %337 = vmatprep.mubr.f32.mxu0 0.0
    %338 = vmatmul.mubr.f32.gmra.mrb[0].mxu0 %v54
    %v339 = vpop.f32.mrb[0].mxu0
    %v340 = vadd.f32 %v106, %v339
    %v341 = vpop.f32.mrb[0].mxu0
    %342 = vmatprep.mubr.f32.mxu0 0.0
    %343 = vmatmul.mubr.f32.gmra.mrb[0].mxu0 %v55
    %v344 = vpop.f32.mrb[0].mxu0
    %v345 = vadd.f32 %v106, %v344
    %v346 = vpop.f32.mrb[0].mxu0
    %347 = vmatprep.mubr.f32.mxu0 0.0
    %348 = vmatmul.mubr.f32.gmra.mrb[0].mxu0 %v56
    %v349 = vpop.f32.mrb[0].mxu0
    %v350 = vadd.f32 %v106, %v349
    %v351 = vpop.f32.mrb[0].mxu0
    %352 = vmatprep.mubr.f32.mxu0 0.0
    %353 = vmatmul.mubr.f32.gmra.mrb[0].mxu0 %v57
    %v354 = vpop.f32.mrb[0].mxu0
    %v355 = vadd.f32 %v106, %v354
    %v356 = vpop.f32.mrb[0].mxu0
    %357 = vmatprep.mubr.f32.mxu0 0.0
    %358 = vmatmul.mubr.f32.gmra.mrb[0].mxu0 %v58
    %v359 = vpop.f32.mrb[0].mxu0
    %v360 = vadd.f32 %v106, %v359
    %v361 = vpop.f32.mrb[0].mxu0
    %362 = vmatprep.mubr.f32.mxu0 0.0
    %363 = vmatmul.mubr.f32.gmra.mrb[0].mxu0 %v59
    %v364 = vpop.f32.mrb[0].mxu0
    %v365 = vadd.f32 %v106, %v364
    %v366 = vpop.f32.mrb[0].mxu0
    %367 = vmatprep.mubr.f32.mxu0 0.0
    %368 = vmatmul.mubr.f32.gmra.mrb[0].mxu0 %v60
    %v369 = vpop.f32.mrb[0].mxu0
    %v370 = vadd.f32 %v106, %v369
    %v371 = vpop.f32.mrb[0].mxu0
    %372 = vmatprep.mubr.f32.mxu0 0.0
    %373 = vmatmul.mubr.f32.gmra.mrb[0].mxu0 %v61
    %v374 = vpop.f32.mrb[0].mxu0
    %v375 = vadd.f32 %v106, %v374
    %v376 = vpop.f32.mrb[0].mxu0
    %377 = vmatprep.mubr.f32.mxu0 0.0
    %378 = vmatmul.mubr.f32.gmra.mrb[0].mxu0 %v62
    %v379 = vpop.f32.mrb[0].mxu0
    %v380 = vadd.f32 %v106, %v379
    %v381 = vpop.f32.mrb[0].mxu0
    %382 = vmatprep.mubr.f32.mxu0 0.0
    %383 = vmatmul.mubr.f32.gmra.mrb[0].mxu0 %v63
    %v384 = vpop.f32.mrb[0].mxu0
    %v385 = vadd.f32 %v106, %v384
    %v386 = vpop.f32.mrb[0].mxu0
    %387 = vmatprep.mubr.f32.mxu0 0.0
    %388 = vmatmul.mubr.f32.gmra.mrb[0].mxu0 %v64
    %v389 = vpop.f32.mrb[0].mxu0
    %v390 = vadd.f32 %v106, %v389
    %v391 = vpop.f32.mrb[0].mxu0
    %392 = vmatprep.mubr.f32.mxu0 0.0
    %393 = vmatmul.mubr.f32.gmra.mrb[0].mxu0 %v65
    %v394 = vpop.f32.mrb[0].mxu0
    %v395 = vadd.f32 %v106, %v394
    %v396 = vpop.f32.mrb[0].mxu0
    %397 = vmatprep.mubr.f32.mxu0 0.0
    %398 = vmatmul.mubr.f32.gmra.mrb[0].mxu0 %v66
    %v399 = vpop.f32.mrb[0].mxu0
    %v400 = vadd.f32 %v106, %v399
    %v401 = vpop.f32.mrb[0].mxu0
    %402 = vmatprep.mubr.f32.mxu0 0.0
    %403 = vmatmul.mubr.f32.gmra.mrb[0].mxu0 %v67
    %v404 = vpop.f32.mrb[0].mxu0
    %v405 = vadd.f32 %v106, %v404
    %v406 = vpop.f32.mrb[0].mxu0
    %407 = vmatprep.mubr.f32.mxu0 0.0
    %408 = vmatmul.mubr.f32.gmra.mrb[0].mxu0 %v68
    %v409 = vpop.f32.mrb[0].mxu0
    %v410 = vadd.f32 %v106, %v409
    %v411 = vpop.f32.mrb[0].mxu0
    %412 = vmatprep.mubr.f32.mxu0 0.0
    %413 = vmatmul.mubr.f32.gmra.mrb[0].mxu0 %v69
    %v414 = vpop.f32.mrb[0].mxu0
    %v415 = vadd.f32 %v106, %v414
    %v416 = vpop.f32.mrb[0].mxu0
    %417 = vmatprep.mubr.f32.mxu0 0.0
    %418 = vmatmul.mubr.f32.gmra.mrb[0].mxu0 %v70
    %v419 = vpop.f32.mrb[0].mxu0
    %v420 = vadd.f32 %v106, %v419
    %v421 = vpop.f32.mrb[0].mxu0
    %422 = vmatprep.mubr.f32.mxu0 0.0
    %423 = vmatmul.mubr.f32.gmra.mrb[0].mxu0 %v71
    %v424 = vpop.f32.mrb[0].mxu0
    %v425 = vadd.f32 %v106, %v424
    %v426 = vpop.f32.mrb[0].mxu0
    %427 = vmatprep.mubr.f32.mxu0 0.0
    %428 = vmatmul.mubr.f32.gmra.mrb[0].mxu0 %v72
    %v429 = vpop.f32.mrb[0].mxu0
    %v430 = vadd.f32 %v106, %v429
    %v431 = vpop.f32.mrb[0].mxu0
    %432 = vmatprep.mubr.f32.mxu0 0.0
    %433 = vmatmul.mubr.f32.gmra.mrb[0].mxu0 %v73
    %v434 = vpop.f32.mrb[0].mxu0
    %v435 = vadd.f32 %v106, %v434
    %v436 = vpop.f32.mrb[0].mxu0
    %437 = vmatprep.mubr.f32.mxu0 0.0
    %438 = vmatmul.mubr.f32.gmra.mrb[0].mxu0 %v74
    %v439 = vpop.f32.mrb[0].mxu0
    %v440 = vadd.f32 %v106, %v439
    %v441 = vpop.f32.mrb[0].mxu0
    %442 = vmatprep.mubr.f32.mxu0 0.0
    %443 = vmatmul.mubr.f32.gmra.mrb[0].mxu0 %v75
    %v444 = vpop.f32.mrb[0].mxu0
    %v445 = vadd.f32 %v106, %v444
    %v446 = vpop.f32.mrb[0].mxu0
    %447 = vmatprep.mubr.f32.mxu0 0.0
    %448 = vmatmul.mubr.f32.gmra.mrb[0].mxu0 %v76
    %v449 = vpop.f32.mrb[0].mxu0
    %v450 = vadd.f32 %v106, %v449
    %v451 = vpop.f32.mrb[0].mxu0
    %452 = vmatprep.mubr.f32.mxu0 0.0
    %453 = vmatmul.mubr.f32.gmra.mrb[0].mxu0 %v77
    %v454 = vpop.f32.mrb[0].mxu0
    %v455 = vadd.f32 %v106, %v454
    %v456 = vpop.f32.mrb[0].mxu0
    %457 = vmatprep.mubr.f32.mxu0 0.0
    %458 = vmatmul.mubr.f32.gmra.mrb[0].mxu0 %v78
    %v459 = vpop.f32.mrb[0].mxu0
    %v460 = vadd.f32 %v106, %v459
    %v461 = vpop.f32.mrb[0].mxu0
    %462 = vmatprep.mubr.f32.mxu0 0.0
    %463 = vmatmul.mubr.f32.gmra.mrb[0].mxu0 %v79
    %v464 = vpop.f32.mrb[0].mxu0
    %v465 = vadd.f32 %v106, %v464
    %v466 = vpop.f32.mrb[0].mxu0
    %467 = vmatprep.mubr.f32.mxu0 0.0
    %468 = vmatmul.mubr.f32.gmra.mrb[0].mxu0 %v80
    %v469 = vpop.f32.mrb[0].mxu0
    %v470 = vadd.f32 %v106, %v469
    %v471 = vpop.f32.mrb[0].mxu0
    %472 = vmatprep.mubr.f32.mxu0 0.0
    %473 = vmatmul.mubr.f32.gmra.mrb[0].mxu0 %v81
    %v474 = vpop.f32.mrb[0].mxu0
    %v475 = vadd.f32 %v106, %v474
    %v476 = vpop.f32.mrb[0].mxu0
    %477 = vmatprep.mubr.f32.mxu0 0.0
    %478 = vmatmul.mubr.f32.gmra.mrb[0].mxu0 %v82
    %v479 = vpop.f32.mrb[0].mxu0
    %v480 = vadd.f32 %v106, %v479
    %v481 = vpop.f32.mrb[0].mxu0
    %482 = vmatprep.mubr.f32.mxu0 0.0
    %483 = vmatmul.mubr.f32.gmra.mrb[0].mxu0 %v83
    %v484 = vpop.f32.mrb[0].mxu0
    %v485 = vadd.f32 %v106, %v484
    %v486 = vpop.f32.mrb[0].mxu0
    %487 = vmatprep.mubr.f32.mxu0 0.0
    %488 = vmatmul.mubr.f32.gmra.mrb[0].mxu0 %v84
    %v489 = vpop.f32.mrb[0].mxu0
    %v490 = vadd.f32 %v106, %v489
    %v491 = vpop.f32.mrb[0].mxu0
    %492 = vdwg.mxu0
    %v493 = vmul.f32 %v175, 0.1
    %v494 = vmul.f32 %v180, 0.1
    %v495 = vmul.f32 %v185, 0.1
    %v496 = vmul.f32 %v190, 0.1
    %v497 = vmul.f32 %v195, 0.1
    %v498 = vmul.f32 %v200, 0.1
    %v499 = vmul.f32 %v205, 0.1
    %v500 = vmul.f32 %v210, 0.1
    %v501 = vmul.f32 %v215, 0.1
    %v502 = vmul.f32 %v220, 0.1
    %v503 = vmul.f32 %v225, 0.1
    %v504 = vmul.f32 %v230, 0.1
    %v505 = vmul.f32 %v235, 0.1
    %v506 = vmul.f32 %v240, 0.1
    %v507 = vmul.f32 %v245, 0.1
    %v508 = vmul.f32 %v250, 0.1
    %v509 = vmul.f32 %v255, 0.1
    %v510 = vmul.f32 %v260, 0.1
    %v511 = vmul.f32 %v265, 0.1
    %v512 = vmul.f32 %v270, 0.1
    %v513 = vmul.f32 %v275, 0.1
    %v514 = vmul.f32 %v280, 0.1
    %v515 = vmul.f32 %v285, 0.1
    %v516 = vmul.f32 %v290, 0.1
    %v517 = vmul.f32 %v295, 0.1
    %v518 = vmul.f32 %v300, 0.1
    %v519 = vmul.f32 %v305, 0.1
    %v520 = vmul.f32 %v310, 0.1
    %v521 = vmul.f32 %v315, 0.1
    %v522 = vmul.f32 %v320, 0.1
    %v523 = vmul.f32 %v325, 0.1
    %v524 = vmul.f32 %v330, 0.1
    %v525 = vmul.f32 %v335, 0.1
    %v526 = vmul.f32 %v340, 0.1
    %v527 = vmul.f32 %v345, 0.1
    %v528 = vmul.f32 %v350, 0.1
    %v529 = vmul.f32 %v355, 0.1
    %v530 = vmul.f32 %v360, 0.1
    %v531 = vmul.f32 %v365, 0.1
    %v532 = vmul.f32 %v370, 0.1
    %v533 = vmul.f32 %v375, 0.1
    %v534 = vmul.f32 %v380, 0.1
    %v535 = vmul.f32 %v385, 0.1
    %v536 = vmul.f32 %v390, 0.1
    %v537 = vmul.f32 %v395, 0.1
    %v538 = vmul.f32 %v400, 0.1
    %v539 = vmul.f32 %v405, 0.1
    %v540 = vmul.f32 %v410, 0.1
    %v541 = vmul.f32 %v415, 0.1
    %v542 = vmul.f32 %v420, 0.1
    %v543 = vmul.f32 %v425, 0.1
    %v544 = vmul.f32 %v430, 0.1
    %v545 = vmul.f32 %v435, 0.1
    %v546 = vmul.f32 %v440, 0.1
    %v547 = vmul.f32 %v445, 0.1
    %v548 = vmul.f32 %v450, 0.1
    %v549 = vmul.f32 %v455, 0.1
    %v550 = vmul.f32 %v460, 0.1
    %v551 = vmul.f32 %v465, 0.1
    %v552 = vmul.f32 %v470, 0.1
    %v553 = vmul.f32 %v475, 0.1
    %v554 = vmul.f32 %v480, 0.1
    %v555 = vmul.f32 %v485, 0.1
    %v556 = vmul.f32 %v490, 0.1
    %v557 = vmax.f32 %v175, %v493
    %v558 = vmax.f32 %v180, %v494
    %v559 = vmax.f32 %v185, %v495
    %v560 = vmax.f32 %v190, %v496
    %v561 = vmax.f32 %v195, %v497
    %v562 = vmax.f32 %v200, %v498
    %v563 = vmax.f32 %v205, %v499
    %v564 = vmax.f32 %v210, %v500
    %v565 = vmax.f32 %v215, %v501
    %v566 = vmax.f32 %v220, %v502
    %v567 = vmax.f32 %v225, %v503
    %v568 = vmax.f32 %v230, %v504
    %v569 = vmax.f32 %v235, %v505
    %v570 = vmax.f32 %v240, %v506
    %v571 = vmax.f32 %v245, %v507
    %v572 = vmax.f32 %v250, %v508
    %v573 = vmax.f32 %v255, %v509
    %v574 = vmax.f32 %v260, %v510
    %v575 = vmax.f32 %v265, %v511
    %v576 = vmax.f32 %v270, %v512
    %v577 = vmax.f32 %v275, %v513
    %v578 = vmax.f32 %v280, %v514
    %v579 = vmax.f32 %v285, %v515
    %v580 = vmax.f32 %v290, %v516
    %v581 = vmax.f32 %v295, %v517
    %v582 = vmax.f32 %v300, %v518
    %v583 = vmax.f32 %v305, %v519
    %v584 = vmax.f32 %v310, %v520
    %v585 = vmax.f32 %v315, %v521
    %v586 = vmax.f32 %v320, %v522
    %v587 = vmax.f32 %v325, %v523
    %v588 = vmax.f32 %v330, %v524
    %v589 = vmax.f32 %v335, %v525
    %v590 = vmax.f32 %v340, %v526
    %v591 = vmax.f32 %v345, %v527
    %v592 = vmax.f32 %v350, %v528
    %v593 = vmax.f32 %v355, %v529
    %v594 = vmax.f32 %v360, %v530
    %v595 = vmax.f32 %v365, %v531
    %v596 = vmax.f32 %v370, %v532
    %v597 = vmax.f32 %v375, %v533
    %v598 = vmax.f32 %v380, %v534
    %v599 = vmax.f32 %v385, %v535
    %v600 = vmax.f32 %v390, %v536
    %v601 = vmax.f32 %v395, %v537
    %v602 = vmax.f32 %v400, %v538
    %v603 = vmax.f32 %v405, %v539
    %v604 = vmax.f32 %v410, %v540
    %v605 = vmax.f32 %v415, %v541
    %v606 = vmax.f32 %v420, %v542
    %v607 = vmax.f32 %v425, %v543
    %v608 = vmax.f32 %v430, %v544
    %v609 = vmax.f32 %v435, %v545
    %v610 = vmax.f32 %v440, %v546
    %v611 = vmax.f32 %v445, %v547
    %v612 = vmax.f32 %v450, %v548
    %v613 = vmax.f32 %v455, %v549
    %v614 = vmax.f32 %v460, %v550
    %v615 = vmax.f32 %v465, %v551
    %v616 = vmax.f32 %v470, %v552
    %v617 = vmax.f32 %v475, %v553
    %v618 = vmax.f32 %v480, %v554
    %v619 = vmax.f32 %v485, %v555
    %v620 = vmax.f32 %v490, %v556
    %v621 = vld [vmem:[%s3] sm:$0xff]
    %v622 = vld [vmem:[%s3 + $0x8] sm:$0xff]
    %v623 = vld [vmem:[%s3 + $0x10] sm:$0xff]
    %v624 = vld [vmem:[%s3 + $0x18] sm:$0xff]
    %v625 = vld [vmem:[%s3 + $0x20] sm:$0xff]
    %v626 = vld [vmem:[%s3 + $0x28] sm:$0xff]
    %v627 = vld [vmem:[%s3 + $0x30] sm:$0xff]
    %v628 = vld [vmem:[%s3 + $0x38] sm:$0xff]
    %v629 = vld [vmem:[%s3 + $0x40] sm:$0xff]
    %v630 = vld [vmem:[%s3 + $0x48] sm:$0xff]
    %v631 = vld [vmem:[%s3 + $0x50] sm:$0xff]
    %v632 = vld [vmem:[%s3 + $0x58] sm:$0xff]
    %v633 = vld [vmem:[%s3 + $0x60] sm:$0xff]
    %v634 = vld [vmem:[%s3 + $0x68] sm:$0xff]
    %v635 = vld [vmem:[%s3 + $0x70] sm:$0xff]
    %v636 = vld [vmem:[%s3 + $0x78] sm:$0xff]
    %v637 = vld [vmem:[%s4] sm:$0x1]
    %v639 = vlaneseq
    %v640 = vshrl.u32 %v639, 7
    %v641 = vsub.s32 0, %v640
    %v642 = vrot.slane %v637, %v641
    %644 = vmatprep.subr.mxu0 0.0
    %645 = vmatpush1.msra.mxu0 %v621
    %646 = vmatprep.subr.mxu0 0.0
    %647 = vmatpush1.msra.mxu0 %v622
    %648 = vmatprep.subr.mxu0 0.0
    %649 = vmatpush1.msra.mxu0 %v623
    %650 = vmatprep.subr.mxu0 0.0
    %651 = vmatpush1.msra.mxu0 %v624
    %652 = vmatprep.subr.mxu0 0.0
    %653 = vmatpush1.msra.mxu0 %v625
    %654 = vmatprep.subr.mxu0 0.0
    %655 = vmatpush1.msra.mxu0 %v626
    %656 = vmatprep.subr.mxu0 0.0
    %657 = vmatpush1.msra.mxu0 %v627
    %658 = vmatprep.subr.mxu0 0.0
    %659 = vmatpush1.msra.mxu0 %v628
    %660 = vmatprep.subr.mxu0 0.0
    %661 = vmatpush1.msra.mxu0 %v629
    %662 = vmatprep.subr.mxu0 0.0
    %663 = vmatpush1.msra.mxu0 %v630
    %664 = vmatprep.subr.mxu0 0.0
    %665 = vmatpush1.msra.mxu0 %v631
    %666 = vmatprep.subr.mxu0 0.0
    %667 = vmatpush1.msra.mxu0 %v632
    %668 = vmatprep.subr.mxu0 0.0
    %669 = vmatpush1.msra.mxu0 %v633
    %670 = vmatprep.subr.mxu0 0.0
    %671 = vmatpush1.msra.mxu0 %v634
    %672 = vmatprep.subr.mxu0 0.0
    %673 = vmatpush1.msra.mxu0 %v635
    %674 = vmatprep.subr.mxu0 0.0
    %675 = vmatpush1.msra.mxu0 %v636
    %676 = vmatprep.subr.mxu0 0.0
    %677 = vmatpush1.msra.mxu0 0.0
    %678 = vmatprep.subr.mxu0 0.0
    %679 = vmatpush1.msra.mxu0 0.0
    %680 = vmatprep.subr.mxu0 0.0
    %681 = vmatpush1.msra.mxu0 0.0
    %682 = vmatprep.subr.mxu0 0.0
    %683 = vmatpush1.msra.mxu0 0.0
    %684 = vmatprep.subr.mxu0 0.0
    %685 = vmatpush1.msra.mxu0 0.0
    %686 = vmatprep.subr.mxu0 0.0
    %687 = vmatpush1.msra.mxu0 0.0
    %688 = vmatprep.subr.mxu0 0.0
    %689 = vmatpush1.msra.mxu0 0.0
    %690 = vmatprep.subr.mxu0 0.0
    %691 = vmatpush1.msra.mxu0 0.0
    %692 = vmatprep.subr.mxu0 0.0
    %693 = vmatpush1.msra.mxu0 0.0
    %694 = vmatprep.subr.mxu0 0.0
    %695 = vmatpush1.msra.mxu0 0.0
    %696 = vmatprep.subr.mxu0 0.0
    %697 = vmatpush1.msra.mxu0 0.0
    %698 = vmatprep.subr.mxu0 0.0
    %699 = vmatpush1.msra.mxu0 0.0
    %700 = vmatprep.subr.mxu0 0.0
    %701 = vmatpush1.msra.mxu0 0.0
    %702 = vmatprep.subr.mxu0 0.0
    %703 = vmatpush1.msra.mxu0 0.0
    %704 = vmatprep.subr.mxu0 0.0
    %705 = vmatpush1.msra.mxu0 0.0
    %706 = vmatprep.subr.mxu0 0.0
    %707 = vmatpush1.msra.mxu0 0.0
    %708 = vmatprep.mubr.f32.mxu0 0.0
    %709 = vmatmul.mubr.f32.gmra.mrb[0].mxu0 %v557
    %v710 = vpop.f32.mrb[0].mxu0
    %v711 = vadd.f32 %v642, %v710
    %v712 = vpop.f32.mrb[0].mxu0
    %713 = vmatprep.mubr.f32.mxu0 0.0
    %714 = vmatmul.mubr.f32.gmra.mrb[0].mxu0 %v558
    %v715 = vpop.f32.mrb[0].mxu0
    %v716 = vadd.f32 %v642, %v715
    %v717 = vpop.f32.mrb[0].mxu0
    %718 = vmatprep.mubr.f32.mxu0 0.0
    %719 = vmatmul.mubr.f32.gmra.mrb[0].mxu0 %v559
    %v720 = vpop.f32.mrb[0].mxu0
    %v721 = vadd.f32 %v642, %v720
    %v722 = vpop.f32.mrb[0].mxu0
    %723 = vmatprep.mubr.f32.mxu0 0.0
    %724 = vmatmul.mubr.f32.gmra.mrb[0].mxu0 %v560
    %v725 = vpop.f32.mrb[0].mxu0
    %v726 = vadd.f32 %v642, %v725
    %v727 = vpop.f32.mrb[0].mxu0
    %728 = vmatprep.mubr.f32.mxu0 0.0
    %729 = vmatmul.mubr.f32.gmra.mrb[0].mxu0 %v561
    %v730 = vpop.f32.mrb[0].mxu0
    %v731 = vadd.f32 %v642, %v730
    %v732 = vpop.f32.mrb[0].mxu0
    %733 = vmatprep.mubr.f32.mxu0 0.0
    %734 = vmatmul.mubr.f32.gmra.mrb[0].mxu0 %v562
    %v735 = vpop.f32.mrb[0].mxu0
    %v736 = vadd.f32 %v642, %v735
    %v737 = vpop.f32.mrb[0].mxu0
    %738 = vmatprep.mubr.f32.mxu0 0.0
    %739 = vmatmul.mubr.f32.gmra.mrb[0].mxu0 %v563
    %v740 = vpop.f32.mrb[0].mxu0
    %v741 = vadd.f32 %v642, %v740
    %v742 = vpop.f32.mrb[0].mxu0
    %743 = vmatprep.mubr.f32.mxu0 0.0
    %744 = vmatmul.mubr.f32.gmra.mrb[0].mxu0 %v564
    %v745 = vpop.f32.mrb[0].mxu0
    %v746 = vadd.f32 %v642, %v745
    %v747 = vpop.f32.mrb[0].mxu0
    %748 = vmatprep.mubr.f32.mxu0 0.0
    %749 = vmatmul.mubr.f32.gmra.mrb[0].mxu0 %v565
    %v750 = vpop.f32.mrb[0].mxu0
    %v751 = vadd.f32 %v642, %v750
    %v752 = vpop.f32.mrb[0].mxu0
    %753 = vmatprep.mubr.f32.mxu0 0.0
    %754 = vmatmul.mubr.f32.gmra.mrb[0].mxu0 %v566
    %v755 = vpop.f32.mrb[0].mxu0
    %v756 = vadd.f32 %v642, %v755
    %v757 = vpop.f32.mrb[0].mxu0
    %758 = vmatprep.mubr.f32.mxu0 0.0
    %759 = vmatmul.mubr.f32.gmra.mrb[0].mxu0 %v567
    %v760 = vpop.f32.mrb[0].mxu0
    %v761 = vadd.f32 %v642, %v760
    %v762 = vpop.f32.mrb[0].mxu0
    %763 = vmatprep.mubr.f32.mxu0 0.0
    %764 = vmatmul.mubr.f32.gmra.mrb[0].mxu0 %v568
    %v765 = vpop.f32.mrb[0].mxu0
    %v766 = vadd.f32 %v642, %v765
    %v767 = vpop.f32.mrb[0].mxu0
    %768 = vmatprep.mubr.f32.mxu0 0.0
    %769 = vmatmul.mubr.f32.gmra.mrb[0].mxu0 %v569
    %v770 = vpop.f32.mrb[0].mxu0
    %v771 = vadd.f32 %v642, %v770
    %v772 = vpop.f32.mrb[0].mxu0
    %773 = vmatprep.mubr.f32.mxu0 0.0
    %774 = vmatmul.mubr.f32.gmra.mrb[0].mxu0 %v570
    %v775 = vpop.f32.mrb[0].mxu0
    %v776 = vadd.f32 %v642, %v775
    %v777 = vpop.f32.mrb[0].mxu0
    %778 = vmatprep.mubr.f32.mxu0 0.0
    %779 = vmatmul.mubr.f32.gmra.mrb[0].mxu0 %v571
    %v780 = vpop.f32.mrb[0].mxu0
    %v781 = vadd.f32 %v642, %v780
    %v782 = vpop.f32.mrb[0].mxu0
    %783 = vmatprep.mubr.f32.mxu0 0.0
    %784 = vmatmul.mubr.f32.gmra.mrb[0].mxu0 %v572
    %v785 = vpop.f32.mrb[0].mxu0
    %v786 = vadd.f32 %v642, %v785
    %v787 = vpop.f32.mrb[0].mxu0
    %788 = vmatprep.mubr.f32.mxu0 0.0
    %789 = vmatmul.mubr.f32.gmra.mrb[0].mxu0 %v573
    %v790 = vpop.f32.mrb[0].mxu0
    %v791 = vadd.f32 %v642, %v790
    %v792 = vpop.f32.mrb[0].mxu0
    %793 = vmatprep.mubr.f32.mxu0 0.0
    %794 = vmatmul.mubr.f32.gmra.mrb[0].mxu0 %v574
    %v795 = vpop.f32.mrb[0].mxu0
    %v796 = vadd.f32 %v642, %v795
    %v797 = vpop.f32.mrb[0].mxu0
    %798 = vmatprep.mubr.f32.mxu0 0.0
    %799 = vmatmul.mubr.f32.gmra.mrb[0].mxu0 %v575
    %v800 = vpop.f32.mrb[0].mxu0
    %v801 = vadd.f32 %v642, %v800
    %v802 = vpop.f32.mrb[0].mxu0
    %803 = vmatprep.mubr.f32.mxu0 0.0
    %804 = vmatmul.mubr.f32.gmra.mrb[0].mxu0 %v576
    %v805 = vpop.f32.mrb[0].mxu0
    %v806 = vadd.f32 %v642, %v805
    %v807 = vpop.f32.mrb[0].mxu0
    %808 = vmatprep.mubr.f32.mxu0 0.0
    %809 = vmatmul.mubr.f32.gmra.mrb[0].mxu0 %v577
    %v810 = vpop.f32.mrb[0].mxu0
    %v811 = vadd.f32 %v642, %v810
    %v812 = vpop.f32.mrb[0].mxu0
    %813 = vmatprep.mubr.f32.mxu0 0.0
    %814 = vmatmul.mubr.f32.gmra.mrb[0].mxu0 %v578
    %v815 = vpop.f32.mrb[0].mxu0
    %v816 = vadd.f32 %v642, %v815
    %v817 = vpop.f32.mrb[0].mxu0
    %818 = vmatprep.mubr.f32.mxu0 0.0
    %819 = vmatmul.mubr.f32.gmra.mrb[0].mxu0 %v579
    %v820 = vpop.f32.mrb[0].mxu0
    %v821 = vadd.f32 %v642, %v820
    %v822 = vpop.f32.mrb[0].mxu0
    %823 = vmatprep.mubr.f32.mxu0 0.0
    %824 = vmatmul.mubr.f32.gmra.mrb[0].mxu0 %v580
    %v825 = vpop.f32.mrb[0].mxu0
    %v826 = vadd.f32 %v642, %v825
    %v827 = vpop.f32.mrb[0].mxu0
    %828 = vmatprep.mubr.f32.mxu0 0.0
    %829 = vmatmul.mubr.f32.gmra.mrb[0].mxu0 %v581
    %v830 = vpop.f32.mrb[0].mxu0
    %v831 = vadd.f32 %v642, %v830
    %v832 = vpop.f32.mrb[0].mxu0
    %833 = vmatprep.mubr.f32.mxu0 0.0
    %834 = vmatmul.mubr.f32.gmra.mrb[0].mxu0 %v582
    %v835 = vpop.f32.mrb[0].mxu0
    %v836 = vadd.f32 %v642, %v835
    %v837 = vpop.f32.mrb[0].mxu0
    %838 = vmatprep.mubr.f32.mxu0 0.0
    %839 = vmatmul.mubr.f32.gmra.mrb[0].mxu0 %v583
    %v840 = vpop.f32.mrb[0].mxu0
    %v841 = vadd.f32 %v642, %v840
    %v842 = vpop.f32.mrb[0].mxu0
    %843 = vmatprep.mubr.f32.mxu0 0.0
    %844 = vmatmul.mubr.f32.gmra.mrb[0].mxu0 %v584
    %v845 = vpop.f32.mrb[0].mxu0
    %v846 = vadd.f32 %v642, %v845
    %v847 = vpop.f32.mrb[0].mxu0
    %848 = vmatprep.mubr.f32.mxu0 0.0
    %849 = vmatmul.mubr.f32.gmra.mrb[0].mxu0 %v585
    %v850 = vpop.f32.mrb[0].mxu0
    %v851 = vadd.f32 %v642, %v850
    %v852 = vpop.f32.mrb[0].mxu0
    %853 = vmatprep.mubr.f32.mxu0 0.0
    %854 = vmatmul.mubr.f32.gmra.mrb[0].mxu0 %v586
    %v855 = vpop.f32.mrb[0].mxu0
    %v856 = vadd.f32 %v642, %v855
    %v857 = vpop.f32.mrb[0].mxu0
    %858 = vmatprep.mubr.f32.mxu0 0.0
    %859 = vmatmul.mubr.f32.gmra.mrb[0].mxu0 %v587
    %v860 = vpop.f32.mrb[0].mxu0
    %v861 = vadd.f32 %v642, %v860
    %v862 = vpop.f32.mrb[0].mxu0
    %863 = vmatprep.mubr.f32.mxu0 0.0
    %864 = vmatmul.mubr.f32.gmra.mrb[0].mxu0 %v588
    %v865 = vpop.f32.mrb[0].mxu0
    %v866 = vadd.f32 %v642, %v865
    %v867 = vpop.f32.mrb[0].mxu0
    %868 = vmatprep.mubr.f32.mxu0 0.0
    %869 = vmatmul.mubr.f32.gmra.mrb[0].mxu0 %v589
    %v870 = vpop.f32.mrb[0].mxu0
    %v871 = vadd.f32 %v642, %v870
    %v872 = vpop.f32.mrb[0].mxu0
    %873 = vmatprep.mubr.f32.mxu0 0.0
    %874 = vmatmul.mubr.f32.gmra.mrb[0].mxu0 %v590
    %v875 = vpop.f32.mrb[0].mxu0
    %v876 = vadd.f32 %v642, %v875
    %v877 = vpop.f32.mrb[0].mxu0
    %878 = vmatprep.mubr.f32.mxu0 0.0
    %879 = vmatmul.mubr.f32.gmra.mrb[0].mxu0 %v591
    %v880 = vpop.f32.mrb[0].mxu0
    %v881 = vadd.f32 %v642, %v880
    %v882 = vpop.f32.mrb[0].mxu0
    %883 = vmatprep.mubr.f32.mxu0 0.0
    %884 = vmatmul.mubr.f32.gmra.mrb[0].mxu0 %v592
    %v885 = vpop.f32.mrb[0].mxu0
    %v886 = vadd.f32 %v642, %v885
    %v887 = vpop.f32.mrb[0].mxu0
    %888 = vmatprep.mubr.f32.mxu0 0.0
    %889 = vmatmul.mubr.f32.gmra.mrb[0].mxu0 %v593
    %v890 = vpop.f32.mrb[0].mxu0
    %v891 = vadd.f32 %v642, %v890
    %v892 = vpop.f32.mrb[0].mxu0
    %893 = vmatprep.mubr.f32.mxu0 0.0
    %894 = vmatmul.mubr.f32.gmra.mrb[0].mxu0 %v594
    %v895 = vpop.f32.mrb[0].mxu0
    %v896 = vadd.f32 %v642, %v895
    %v897 = vpop.f32.mrb[0].mxu0
    %898 = vmatprep.mubr.f32.mxu0 0.0
    %899 = vmatmul.mubr.f32.gmra.mrb[0].mxu0 %v595
    %v900 = vpop.f32.mrb[0].mxu0
    %v901 = vadd.f32 %v642, %v900
    %v902 = vpop.f32.mrb[0].mxu0
    %903 = vmatprep.mubr.f32.mxu0 0.0
    %904 = vmatmul.mubr.f32.gmra.mrb[0].mxu0 %v596
    %v905 = vpop.f32.mrb[0].mxu0
    %v906 = vadd.f32 %v642, %v905
    %v907 = vpop.f32.mrb[0].mxu0
    %908 = vmatprep.mubr.f32.mxu0 0.0
    %909 = vmatmul.mubr.f32.gmra.mrb[0].mxu0 %v597
    %v910 = vpop.f32.mrb[0].mxu0
    %v911 = vadd.f32 %v642, %v910
    %v912 = vpop.f32.mrb[0].mxu0
    %913 = vmatprep.mubr.f32.mxu0 0.0
    %914 = vmatmul.mubr.f32.gmra.mrb[0].mxu0 %v598
    %v915 = vpop.f32.mrb[0].mxu0
    %v916 = vadd.f32 %v642, %v915
    %v917 = vpop.f32.mrb[0].mxu0
    %918 = vmatprep.mubr.f32.mxu0 0.0
    %919 = vmatmul.mubr.f32.gmra.mrb[0].mxu0 %v599
    %v920 = vpop.f32.mrb[0].mxu0
    %v921 = vadd.f32 %v642, %v920
    %v922 = vpop.f32.mrb[0].mxu0
    %923 = vmatprep.mubr.f32.mxu0 0.0
    %924 = vmatmul.mubr.f32.gmra.mrb[0].mxu0 %v600
    %v925 = vpop.f32.mrb[0].mxu0
    %v926 = vadd.f32 %v642, %v925
    %v927 = vpop.f32.mrb[0].mxu0
    %928 = vmatprep.mubr.f32.mxu0 0.0
    %929 = vmatmul.mubr.f32.gmra.mrb[0].mxu0 %v601
    %v930 = vpop.f32.mrb[0].mxu0
    %v931 = vadd.f32 %v642, %v930
    %v932 = vpop.f32.mrb[0].mxu0
    %933 = vmatprep.mubr.f32.mxu0 0.0
    %934 = vmatmul.mubr.f32.gmra.mrb[0].mxu0 %v602
    %v935 = vpop.f32.mrb[0].mxu0
    %v936 = vadd.f32 %v642, %v935
    %v937 = vpop.f32.mrb[0].mxu0
    %938 = vmatprep.mubr.f32.mxu0 0.0
    %939 = vmatmul.mubr.f32.gmra.mrb[0].mxu0 %v603
    %v940 = vpop.f32.mrb[0].mxu0
    %v941 = vadd.f32 %v642, %v940
    %v942 = vpop.f32.mrb[0].mxu0
    %943 = vmatprep.mubr.f32.mxu0 0.0
    %944 = vmatmul.mubr.f32.gmra.mrb[0].mxu0 %v604
    %v945 = vpop.f32.mrb[0].mxu0
    %v946 = vadd.f32 %v642, %v945
    %v947 = vpop.f32.mrb[0].mxu0
    %948 = vmatprep.mubr.f32.mxu0 0.0
    %949 = vmatmul.mubr.f32.gmra.mrb[0].mxu0 %v605
    %v950 = vpop.f32.mrb[0].mxu0
    %v951 = vadd.f32 %v642, %v950
    %v952 = vpop.f32.mrb[0].mxu0
    %953 = vmatprep.mubr.f32.mxu0 0.0
    %954 = vmatmul.mubr.f32.gmra.mrb[0].mxu0 %v606
    %v955 = vpop.f32.mrb[0].mxu0
    %v956 = vadd.f32 %v642, %v955
    %v957 = vpop.f32.mrb[0].mxu0
    %958 = vmatprep.mubr.f32.mxu0 0.0
    %959 = vmatmul.mubr.f32.gmra.mrb[0].mxu0 %v607
    %v960 = vpop.f32.mrb[0].mxu0
    %v961 = vadd.f32 %v642, %v960
    %v962 = vpop.f32.mrb[0].mxu0
    %963 = vmatprep.mubr.f32.mxu0 0.0
    %964 = vmatmul.mubr.f32.gmra.mrb[0].mxu0 %v608
    %v965 = vpop.f32.mrb[0].mxu0
    %v966 = vadd.f32 %v642, %v965
    %v967 = vpop.f32.mrb[0].mxu0
    %968 = vmatprep.mubr.f32.mxu0 0.0
    %969 = vmatmul.mubr.f32.gmra.mrb[0].mxu0 %v609
    %v970 = vpop.f32.mrb[0].mxu0
    %v971 = vadd.f32 %v642, %v970
    %v972 = vpop.f32.mrb[0].mxu0
    %973 = vmatprep.mubr.f32.mxu0 0.0
    %974 = vmatmul.mubr.f32.gmra.mrb[0].mxu0 %v610
    %v975 = vpop.f32.mrb[0].mxu0
    %v976 = vadd.f32 %v642, %v975
    %v977 = vpop.f32.mrb[0].mxu0
    %978 = vmatprep.mubr.f32.mxu0 0.0
    %979 = vmatmul.mubr.f32.gmra.mrb[0].mxu0 %v611
    %v980 = vpop.f32.mrb[0].mxu0
    %v981 = vadd.f32 %v642, %v980
    %v982 = vpop.f32.mrb[0].mxu0
    %983 = vmatprep.mubr.f32.mxu0 0.0
    %984 = vmatmul.mubr.f32.gmra.mrb[0].mxu0 %v612
    %v985 = vpop.f32.mrb[0].mxu0
    %v986 = vadd.f32 %v642, %v985
    %v987 = vpop.f32.mrb[0].mxu0
    %988 = vmatprep.mubr.f32.mxu0 0.0
    %989 = vmatmul.mubr.f32.gmra.mrb[0].mxu0 %v613
    %v990 = vpop.f32.mrb[0].mxu0
    %v991 = vadd.f32 %v642, %v990
    %v992 = vpop.f32.mrb[0].mxu0
    %993 = vmatprep.mubr.f32.mxu0 0.0
    %994 = vmatmul.mubr.f32.gmra.mrb[0].mxu0 %v614
    %v995 = vpop.f32.mrb[0].mxu0
    %v996 = vadd.f32 %v642, %v995
    %v997 = vpop.f32.mrb[0].mxu0
    %998 = vmatprep.mubr.f32.mxu0 0.0
    %999 = vmatmul.mubr.f32.gmra.mrb[0].mxu0 %v615
    %v1000 = vpop.f32.mrb[0].mxu0
    %v1001 = vadd.f32 %v642, %v1000
    %v1002 = vpop.f32.mrb[0].mxu0
    %1003 = vmatprep.mubr.f32.mxu0 0.0
    %1004 = vmatmul.mubr.f32.gmra.mrb[0].mxu0 %v616
    %v1005 = vpop.f32.mrb[0].mxu0
    %v1006 = vadd.f32 %v642, %v1005
    %v1007 = vpop.f32.mrb[0].mxu0
    %1008 = vmatprep.mubr.f32.mxu0 0.0
    %1009 = vmatmul.mubr.f32.gmra.mrb[0].mxu0 %v617
    %v1010 = vpop.f32.mrb[0].mxu0
    %v1011 = vadd.f32 %v642, %v1010
    %v1012 = vpop.f32.mrb[0].mxu0
    %1013 = vmatprep.mubr.f32.mxu0 0.0
    %1014 = vmatmul.mubr.f32.gmra.mrb[0].mxu0 %v618
    %v1015 = vpop.f32.mrb[0].mxu0
    %v1016 = vadd.f32 %v642, %v1015
    %v1017 = vpop.f32.mrb[0].mxu0
    %1018 = vmatprep.mubr.f32.mxu0 0.0
    %1019 = vmatmul.mubr.f32.gmra.mrb[0].mxu0 %v619
    %v1020 = vpop.f32.mrb[0].mxu0
    %v1021 = vadd.f32 %v642, %v1020
    %v1022 = vpop.f32.mrb[0].mxu0
    %1023 = vmatprep.mubr.f32.mxu0 0.0
    %1024 = vmatmul.mubr.f32.gmra.mrb[0].mxu0 %v620
    %v1025 = vpop.f32.mrb[0].mxu0
    %v1026 = vadd.f32 %v642, %v1025
    %v1027 = vpop.f32.mrb[0].mxu0
    %1028 = vdwg.mxu0
    %1029 = vst [vmem:[#allocation2] sm:$0xff] %v711
    %1030 = vst [vmem:[#allocation2 + $0x8] sm:$0xff] %v716
    %1031 = vst [vmem:[#allocation2 + $0x10] sm:$0xff] %v721
    %1032 = vst [vmem:[#allocation2 + $0x18] sm:$0xff] %v726
    %1033 = vst [vmem:[#allocation2 + $0x20] sm:$0xff] %v731
    %1034 = vst [vmem:[#allocation2 + $0x28] sm:$0xff] %v736
    %1035 = vst [vmem:[#allocation2 + $0x30] sm:$0xff] %v741
    %1036 = vst [vmem:[#allocation2 + $0x38] sm:$0xff] %v746
    %1037 = vst [vmem:[#allocation2 + $0x40] sm:$0xff] %v751
    %1038 = vst [vmem:[#allocation2 + $0x48] sm:$0xff] %v756
    %1039 = vst [vmem:[#allocation2 + $0x50] sm:$0xff] %v761
    %1040 = vst [vmem:[#allocation2 + $0x58] sm:$0xff] %v766
    %1041 = vst [vmem:[#allocation2 + $0x60] sm:$0xff] %v771
    %1042 = vst [vmem:[#allocation2 + $0x68] sm:$0xff] %v776
    %1043 = vst [vmem:[#allocation2 + $0x70] sm:$0xff] %v781
    %1044 = vst [vmem:[#allocation2 + $0x78] sm:$0xff] %v786
    %1045 = vst [vmem:[#allocation2 + $0x80] sm:$0xff] %v791
    %1046 = vst [vmem:[#allocation2 + $0x88] sm:$0xff] %v796
    %1047 = vst [vmem:[#allocation2 + $0x90] sm:$0xff] %v801
    %1048 = vst [vmem:[#allocation2 + $0x98] sm:$0xff] %v806
    %1049 = vst [vmem:[#allocation2 + $0xa0] sm:$0xff] %v811
    %1050 = vst [vmem:[#allocation2 + $0xa8] sm:$0xff] %v816
    %1051 = vst [vmem:[#allocation2 + $0xb0] sm:$0xff] %v821
    %1052 = vst [vmem:[#allocation2 + $0xb8] sm:$0xff] %v826
    %1053 = vst [vmem:[#allocation2 + $0xc0] sm:$0xff] %v831
    %1054 = vst [vmem:[#allocation2 + $0xc8] sm:$0xff] %v836
    %1055 = vst [vmem:[#allocation2 + $0xd0] sm:$0xff] %v841
    %1056 = vst [vmem:[#allocation2 + $0xd8] sm:$0xff] %v846
    %1057 = vst [vmem:[#allocation2 + $0xe0] sm:$0xff] %v851
    %1058 = vst [vmem:[#allocation2 + $0xe8] sm:$0xff] %v856
    %1059 = vst [vmem:[#allocation2 + $0xf0] sm:$0xff] %v861
    %1060 = vst [vmem:[#allocation2 + $0xf8] sm:$0xff] %v866
    %1061 = vst [vmem:[#allocation2 + $0x100] sm:$0xff] %v871
    %1062 = vst [vmem:[#allocation2 + $0x108] sm:$0xff] %v876
    %1063 = vst [vmem:[#allocation2 + $0x110] sm:$0xff] %v881
    %1064 = vst [vmem:[#allocation2 + $0x118] sm:$0xff] %v886
    %1065 = vst [vmem:[#allocation2 + $0x120] sm:$0xff] %v891
    %1066 = vst [vmem:[#allocation2 + $0x128] sm:$0xff] %v896
    %1067 = vst [vmem:[#allocation2 + $0x130] sm:$0xff] %v901
    %1068 = vst [vmem:[#allocation2 + $0x138] sm:$0xff] %v906
    %1069 = vst [vmem:[#allocation2 + $0x140] sm:$0xff] %v911
    %1070 = vst [vmem:[#allocation2 + $0x148] sm:$0xff] %v916
    %1071 = vst [vmem:[#allocation2 + $0x150] sm:$0xff] %v921
    %1072 = vst [vmem:[#allocation2 + $0x158] sm:$0xff] %v926
    %1073 = vst [vmem:[#allocation2 + $0x160] sm:$0xff] %v931
    %1074 = vst [vmem:[#allocation2 + $0x168] sm:$0xff] %v936
    %1075 = vst [vmem:[#allocation2 + $0x170] sm:$0xff] %v941
    %1076 = vst [vmem:[#allocation2 + $0x178] sm:$0xff] %v946
    %1077 = vst [vmem:[#allocation2 + $0x180] sm:$0xff] %v951
    %1078 = vst [vmem:[#allocation2 + $0x188] sm:$0xff] %v956
    %1079 = vst [vmem:[#allocation2 + $0x190] sm:$0xff] %v961
    %1080 = vst [vmem:[#allocation2 + $0x198] sm:$0xff] %v966
    %1081 = vst [vmem:[#allocation2 + $0x1a0] sm:$0xff] %v971
    %1082 = vst [vmem:[#allocation2 + $0x1a8] sm:$0xff] %v976
    %1083 = vst [vmem:[#allocation2 + $0x1b0] sm:$0xff] %v981
    %1084 = vst [vmem:[#allocation2 + $0x1b8] sm:$0xff] %v986
    %1085 = vst [vmem:[#allocation2 + $0x1c0] sm:$0xff] %v991
    %1086 = vst [vmem:[#allocation2 + $0x1c8] sm:$0xff] %v996
    %1087 = vst [vmem:[#allocation2 + $0x1d0] sm:$0xff] %v1001
    %1088 = vst [vmem:[#allocation2 + $0x1d8] sm:$0xff] %v1006
    %1089 = vst [vmem:[#allocation2 + $0x1e0] sm:$0xff] %v1011
    %1090 = vst [vmem:[#allocation2 + $0x1e8] sm:$0xff] %v1016
    %1091 = vst [vmem:[#allocation2 + $0x1f0] sm:$0xff] %v1021
    %1092 = vst [vmem:[#allocation2 + $0x1f8] sm:$0xff] %v1026
    // Predicated region
    $region22: #{_yolo_head_impl.1} parent=1 // pred_check
      _
    $region23: #{_yolo_head_impl.1} parent=1 // pred_check_branch
      %1094 = sbr.rel (0) target = $region25
    $region24: #{_yolo_head_impl.1} parent=1 // pred_region
      %s1096 = ssub.s32 8192, 8192
      %1097 = vsyncadd [#allocation3], %s1096
      %s1098 = sshll.u32 [#allocation2], 4
      %s1099 = int_to_ptr.vmem [resolvable:$true] %s1098
      %1104 = dma.vmem_to_hbm [thread:$0]  %s1099, 8192, %s5, [#allocation3], 128, 128, 8
    $region25: #{_yolo_head_impl.1} parent=1 // pred_fallthru
      _
    // Predicated region
    $region26: #{_yolo_head_impl.1} parent=1 // pred_check
      _
    $region27: #{_yolo_head_impl.1} parent=1 // pred_check_branch
      %1106 = sbr.rel (0) target = $region29
    $region28: #{_yolo_head_impl.1} parent=1 // pred_region
      %1107 = dma.done [#allocation3], 8192
    $region29: #{_yolo_head_impl.1} parent=1 // pred_fallthru
      _
    %1108 = vsyncpa [#allocation3], 1

</llo_original>
